<compile_context>
chip_gen: v7x
topology: tpu7x:2x2x1
jax: 0.10.0
libtpu: 0.0.40
codegen_flags: <defaults>
</compile_context>

<pallas_src>
import math
import functools

import jax
import jax.numpy as jnp
from jax.experimental import pallas as pl
from jax.experimental.pallas import tpu as pltpu

_EPS = 1e-6     # OpenNMT LayerNorm eps
_NEG = -1e9     # additive mask value


# ----------------------------------------------------------------------------
# Pallas kernels
# ----------------------------------------------------------------------------
def _ln(x, g, b):
    mu = jnp.mean(x, axis=-1, keepdims=True)
    var = jnp.mean((x - mu) ** 2, axis=-1, keepdims=True)
    return (x - mu) * jax.lax.rsqrt(var + _EPS) * g + b


def _layernorm_kernel(x_ref, g_ref, b_ref, o_ref):
    o_ref[...] = _ln(x_ref[...], g_ref[...], b_ref[...])


def _ln_linear_kernel(x_ref, g_ref, b_ref, w_ref, bias_ref, o_ref):
    # fused LayerNorm -> Linear (bf16 MXU, f32 accumulate)
    xn = _ln(x_ref[...], g_ref[...], b_ref[...])
    o_ref[...] = (
        jnp.dot(xn.astype(jnp.bfloat16), w_ref[...],
                preferred_element_type=jnp.float32) + bias_ref[...]
    )


def _linear_kernel(x_ref, w_ref, bias_ref, o_ref):
    o_ref[...] = (
        jnp.dot(x_ref[...].astype(jnp.bfloat16), w_ref[...],
                preferred_element_type=jnp.float32) + bias_ref[...]
    )


def _linear_residual_kernel(x_ref, w_ref, bias_ref, r_ref, o_ref):
    # fused Linear -> +residual (attention output projection)
    o_ref[...] = (
        jnp.dot(x_ref[...].astype(jnp.bfloat16), w_ref[...],
                preferred_element_type=jnp.float32) + bias_ref[...] + r_ref[...]
    )


def _ffn_kernel(x_ref, g_ref, b_ref, w1_ref, b1_ref, w2_ref, b2_ref, o_ref):
    # fused PositionwiseFeedForward: LN -> W1 -> ReLU -> W2 -> +residual
    x = x_ref[...]
    xn = _ln(x, g_ref[...], b_ref[...])
    h = jnp.dot(xn.astype(jnp.bfloat16), w1_ref[...],
                preferred_element_type=jnp.float32) + b1_ref[...]
    h = jnp.maximum(h, 0.0)
    o_ref[...] = (
        jnp.dot(h.astype(jnp.bfloat16), w2_ref[...],
                preferred_element_type=jnp.float32) + b2_ref[...] + x
    )


def _generator_kernel(x_ref, w_ref, bias_ref, o_ref):
    # fused Linear -> LogSoftmax
    logits = jnp.dot(x_ref[...].astype(jnp.bfloat16), w_ref[...],
                     preferred_element_type=jnp.float32) + bias_ref[...]
    z = logits - jnp.max(logits, axis=-1, keepdims=True)
    o_ref[...] = z - jnp.log(jnp.sum(jnp.exp(z), axis=-1, keepdims=True))


def _attn_kernel(q_ref, k_ref, v_ref, m_ref, o_ref, p_ref, *, heads, dk, scale):
    # one batch element per grid step; all heads processed here.
    q = q_ref[0]          # (Lq, D) f32
    k = k_ref[0]          # (Lk, D) f32
    v = v_ref[0]          # (Lk, D) f32
    mask = m_ref[0]       # (Lq, Lk) additive f32, shared across heads
    outs = []
    p0 = None
    for h in range(heads):            # static unroll over heads
        sl = slice(h * dk, (h + 1) * dk)
        qh = q[:, sl].astype(jnp.bfloat16)
        kh = k[:, sl].astype(jnp.bfloat16)
        vh = v[:, sl].astype(jnp.bfloat16)
        s = jax.lax.dot_general(qh, kh, (((1,), (1,)), ((), ())),
                                preferred_element_type=jnp.float32) * scale + mask
        s = s - jnp.max(s, axis=-1, keepdims=True)
        e = jnp.exp(s)
        p = e * pl.reciprocal(jnp.sum(e, axis=-1, keepdims=True), approx=True)
        outs.append(jnp.dot(p.astype(jnp.bfloat16), vh,
                            preferred_element_type=jnp.float32))
        if h == 0:
            p0 = p                     # only head 0 is consumed downstream
    o_ref[0] = jnp.concatenate(outs, axis=-1)   # lane-dense (Lq, D) store
    p_ref[0] = p0


# ----------------------------------------------------------------------------
# Row-tiled pallas_call helper
# ----------------------------------------------------------------------------
def _round_up(x, m):
    return ((x + m - 1) // m) * m


def _row_plan(M, cap=256):
    """Returns (tile_rows, padded_M, grid)."""
    if M <= cap:
        return M, M, 1
    tm = cap
    Mp = _round_up(M, tm)
    return tm, Mp, Mp // tm


def _tiled_call(kernel, args, kinds, out_dim, tm_cap=256):
    """Row-tiled pallas_call. kinds[i] in {"row","full"}; "row" args are (M, Ki)."""
    M = next(a.shape[0] for a, kd in zip(args, kinds) if kd == "row")
    tm, Mp, g = _row_plan(M, tm_cap)
    proc = []
    for a, kd in zip(args, kinds):
        if kd == "row" and Mp != M:
            a = jnp.pad(a, ((0, Mp - M), (0, 0)))
        proc.append(a)
    in_specs = [
        pl.BlockSpec((tm, a.shape[1]), lambda i: (i, 0)) if kd == "row"
        else pl.BlockSpec(a.shape, lambda i: (0, 0))
        for a, kd in zip(proc, kinds)
    ]
    out = pl.pallas_call(
        kernel,
        out_shape=jax.ShapeDtypeStruct((Mp, out_dim), jnp.float32),
        grid=(g,),
        in_specs=in_specs,
        out_specs=pl.BlockSpec((tm, out_dim), lambda i: (i, 0)),
        compiler_params=pltpu.CompilerParams(dimension_semantics=("parallel",)),
    )(*proc)
    return out if Mp == M else out[:M]


def layer_norm(x, g, b):
    M, K = x.shape
    return _tiled_call(_layernorm_kernel,
                       [x, g.reshape(1, K), b.reshape(1, K)],
                       ["row", "full", "full"], K)


def ln_linear(x, g, b, w, bias):
    M, K = x.shape
    N = w.shape[1]
    return _tiled_call(_ln_linear_kernel,
                       [x, g.reshape(1, K), b.reshape(1, K), w, bias.reshape(1, N)],
                       ["row", "full", "full", "full", "full"], N)


def linear(x, w, bias):
    N = w.shape[1]
    return _tiled_call(_linear_kernel, [x, w, bias.reshape(1, N)],
                       ["row", "full", "full"], N)


def linear_residual(x, w, bias, res):
    N = w.shape[1]
    return _tiled_call(_linear_residual_kernel, [x, w, bias.reshape(1, N), res],
                       ["row", "full", "full", "row"], N)


def ffn(x, p):
    M, K = x.shape
    F = p["w1"].shape[1]
    return _tiled_call(_ffn_kernel,
                       [x, p["ln_g"].reshape(1, K), p["ln_b"].reshape(1, K),
                        p["w1"], p["b1"].reshape(1, F),
                        p["w2"], p["b2"].reshape(1, K)],
                       ["row", "full", "full", "full", "full", "full", "full"], K)


def generator(x, w, bias):
    V = w.shape[1]
    return _tiled_call(_generator_kernel, [x, w, bias.reshape(1, V)],
                       ["row", "full", "full"], V)


def sdp_attention(q, k, v, add_mask, heads):
    """q: (B, Lq, D), k/v: (B, Lk, D), add_mask: (B, Lq, Lk) additive f32.
    Returns (context (B, Lq, D), head-0 probs (B, Lq, Lk))."""
    B, Lq, D = q.shape
    Lk = k.shape[1]
    dk = D // heads
    scale = 1.0 / math.sqrt(dk)
    kern = functools.partial(_attn_kernel, heads=heads, dk=dk, scale=scale)
    out, p0 = pl.pallas_call(
        kern,
        out_shape=(jax.ShapeDtypeStruct((B, Lq, D), jnp.float32),
                   jax.ShapeDtypeStruct((B, Lq, Lk), jnp.float32)),
        grid=(B,),
        in_specs=[
            pl.BlockSpec((1, Lq, D), lambda b: (b, 0, 0)),
            pl.BlockSpec((1, Lk, D), lambda b: (b, 0, 0)),
            pl.BlockSpec((1, Lk, D), lambda b: (b, 0, 0)),
            pl.BlockSpec((1, Lq, Lk), lambda b: (b, 0, 0)),
        ],
        out_specs=(
            pl.BlockSpec((1, Lq, D), lambda b: (b, 0, 0)),
            pl.BlockSpec((1, Lq, Lk), lambda b: (b, 0, 0)),
        ),
        compiler_params=pltpu.CompilerParams(dimension_semantics=("parallel",)),
    )(q, k, v, add_mask)
    return out, p0


# ----------------------------------------------------------------------------
# Model pieces (OpenNMT-style transformer; dropout in eval mode == identity)
# ----------------------------------------------------------------------------
def sinusoidal_pe(max_len, d_model):
    pos = jnp.arange(max_len, dtype=jnp.float32)[:, None]
    i = jnp.arange(0, d_model, 2, dtype=jnp.float32)[None, :]
    div = jnp.exp(-math.log(10000.0) * i / d_model)
    pe = jnp.zeros((max_len, d_model), jnp.float32)
    pe = pe.at[:, 0::2].set(jnp.sin(pos * div))
    pe = pe.at[:, 1::2].set(jnp.cos(pos * div))
    return pe


def embed(table, tokens, pe, d_model):
    # tokens: (L, B) int32 -> (L, B, D); pad row of table is zero, PE added everywhere.
    e = table[tokens] * math.sqrt(d_model)
    return e + pe[: tokens.shape[0]][:, None, :]


def self_attention_block(p, x_flat, B, L, heads, add_mask, ln_g, ln_b):
    """Fused LN -> QKV proj -> attention -> out proj + residual."""
    D = x_flat.shape[1]
    qkv = ln_linear(x_flat, ln_g, ln_b, p["wqkv"], p["bqkv"])       # (B*L, 3D)
    qkv = qkv.reshape(B, L, 3 * D)
    q, k, v = qkv[..., :D], qkv[..., D:2 * D], qkv[..., 2 * D:]
    ctx, attn0 = sdp_attention(q, k, v, add_mask, heads)            # (B, L, D)
    out = linear_residual(ctx.reshape(B * L, D), p["wo"], p["bo"], x_flat)
    return out, attn0


def encoder_layer(p, x_flat, B, L, heads, add_mask):
    attn_out, _ = self_attention_block(p["self_attn"], x_flat, B, L, heads,
                                       add_mask, p["ln_g"], p["ln_b"])
    return ffn(attn_out, p["ffn"])


def decoder_layer(p, y_flat, B, Lt, memory_flat, Ls, heads, self_mask, cross_mask):
    D = y_flat.shape[1]
    # self attention
    q_out, _ = self_attention_block(p["self_attn"], y_flat, B, Lt, heads,
                                    self_mask, p["ln1_g"], p["ln1_b"])
    # context attention: Q from LN(q_out), K/V from (already layer-normed) memory
    cp = p["ctx_attn"]
    qp = ln_linear(q_out, p["ln2_g"], p["ln2_b"], cp["wq"], cp["bq"])     # (B*Lt, D)
    kv = linear(memory_flat, cp["wkv"], cp["bkv"]).reshape(B, Ls, 2 * D)  # (B, Ls, 2D)
    k_mem, v_mem = kv[..., :D], kv[..., D:]
    ctx, attn0 = sdp_attention(qp.reshape(B, Lt, D), k_mem, v_mem, cross_mask, heads)
    mid = linear_residual(ctx.reshape(B * Lt, D), cp["wo"], cp["bo"], q_out)
    return ffn(mid, p["ffn"]), attn0


def molecular_transformer_forward(params, src, tgt_full, cfg):
    """src: (src_len, B) int32; tgt_full: (tgt_len, B) int32.
    Returns (generative_scores, attns, src_reps, tgt_reps)."""
    D, H, pad = cfg["d_model"], cfg["heads"], cfg["pad"]
    tgt = tgt_full[:-1]                       # tgt = tgt[:-1]
    Ls, B = src.shape
    Lt = tgt.shape[0]

    # ---------------- encoder ----------------
    src_emb = embed(params["emb_src"], src, params["pe"], D)      # (Ls, B, D)
    x = src_emb.transpose(1, 0, 2).reshape(B * Ls, D)             # (B*Ls, D)
    src_pad = (src.T == pad)                                      # (B, Ls)
    enc_mask = jnp.broadcast_to(
        jnp.where(src_pad, _NEG, 0.0).astype(jnp.float32)[:, None, :], (B, Ls, Ls))
    for lp in params["enc_layers"]:
        x = encoder_layer(lp, x, B, Ls, H, enc_mask)
    x = layer_norm(x, params["enc_ln_g"], params["enc_ln_b"])     # (B*Ls, D)
    enc_out = x.reshape(B, Ls, D)
    encoder_outputs = enc_out.transpose(1, 0, 2)                  # (Ls, B, D)
    del encoder_outputs  # kept notionally; memory for decoder is `x` (flat)

    # TODO(synk): exact src/tgt rep extraction lives in the (unprovided) encoder/decoder
    # classes; masked mean over non-pad tokens is used here as the pooled representation.
    src_w = (~src_pad).astype(jnp.float32)
    src_reps = jnp.einsum("bld,bl->bd", enc_out, src_w) / jnp.maximum(
        src_w.sum(-1, keepdims=True), 1.0)

    # ---------------- decoder ----------------
    tgt_emb = embed(params["emb_tgt"], tgt, params["pe"], D)      # (Lt, B, D)
    y = tgt_emb.transpose(1, 0, 2).reshape(B * Lt, D)             # (B*Lt, D)
    tgt_pad = (tgt.T == pad)                                      # (B, Lt)
    subsequent = jnp.triu(jnp.ones((Lt, Lt), dtype=bool), k=1)
    self_mask = jnp.where(tgt_pad[:, None, :] | subsequent[None],
                          _NEG, 0.0).astype(jnp.float32)          # (B, Lt, Lt)
    cross_mask = jnp.broadcast_to(
        jnp.where(src_pad, _NEG, 0.0).astype(jnp.float32)[:, None, :], (B, Lt, Ls))
    attn0 = None
    for lp in params["dec_layers"]:
        y, attn0 = decoder_layer(lp, y, B, Lt, x, Ls, H, self_mask, cross_mask)
    y = layer_norm(y, params["dec_ln_g"], params["dec_ln_b"])     # (B*Lt, D)
    dec_out = y.reshape(B, Lt, D)
    decoder_outputs = dec_out.transpose(1, 0, 2)                  # (Lt, B, D)

    tgt_w = (~tgt_pad).astype(jnp.float32)
    tgt_reps = jnp.einsum("bld,bl->bd", dec_out, tgt_w) / jnp.maximum(
        tgt_w.sum(-1, keepdims=True), 1.0)

    # attns dict, "std" entry as [tgt_len, batch, src_len] (head 0, last layer)
    attns = {"std": attn0.transpose(1, 0, 2)}

    # ---------------- generator (Linear + LogSoftmax, fused, row-tiled) ----------------
    generative_scores = generator(
        decoder_outputs.reshape(Lt * B, D), params["gen_w"], params["gen_b"]
    ).reshape(Lt, B, cfg["vocab_tgt"])

    return generative_scores, attns, src_reps, tgt_reps


# ----------------------------------------------------------------------------
# Deterministic parameter init (matmul weights stored bf16 for the MXU)
# ----------------------------------------------------------------------------
def init_params(key, cfg):
    D, H, F = cfg["d_model"], cfg["heads"], cfg["d_ff"]
    Vs, Vt = cfg["vocab_src"], cfg["vocab_tgt"]
    keys = iter(jax.random.split(key, 1024))

    def dense(shape, dtype=jnp.bfloat16):
        return (0.02 * jax.random.normal(next(keys), shape, jnp.float32)).astype(dtype)

    def ln_pair():
        return jnp.ones((D,), jnp.float32), jnp.zeros((D,), jnp.float32)

    def mha_self():
        # fused Wq|Wk|Wv
        return dict(wqkv=dense((D, 3 * D)), bqkv=jnp.zeros((3 * D,), jnp.float32),
                    wo=dense((D, D)), bo=jnp.zeros((D,), jnp.float32))

    def mha_ctx():
        # Q separate (takes LN'd query), fused Wk|Wv for memory
        return dict(wq=dense((D, D)), bq=jnp.zeros((D,), jnp.float32),
                    wkv=dense((D, 2 * D)), bkv=jnp.zeros((2 * D,), jnp.float32),
                    wo=dense((D, D)), bo=jnp.zeros((D,), jnp.float32))

    def ffn_p():
        g, b = ln_pair()
        return dict(ln_g=g, ln_b=b,
                    w1=dense((D, F)), b1=jnp.zeros((F,), jnp.float32),
                    w2=dense((F, D)), b2=jnp.zeros((D,), jnp.float32))

    emb_src = dense((Vs + 1, D), jnp.float32).at[cfg["pad"]].set(0.0)
    emb_tgt = dense((Vt + 1, D), jnp.float32).at[cfg["pad"]].set(0.0)

    enc_layers = []
    for _ in range(cfg["enc_layers"]):
        g, b = ln_pair()
        enc_layers.append(dict(ln_g=g, ln_b=b, self_attn=mha_self(), ffn=ffn_p()))
    dec_layers = []
    for _ in range(cfg["dec_layers"]):
        g1, b1 = ln_pair()
        g2, b2 = ln_pair()
        dec_layers.append(dict(ln1_g=g1, ln1_b=b1, self_attn=mha_self(),
                               ln2_g=g2, ln2_b=b2, ctx_attn=mha_ctx(), ffn=ffn_p()))

    eg, eb = ln_pair()
    dg, db = ln_pair()
    return dict(
        emb_src=emb_src, emb_tgt=emb_tgt, pe=sinusoidal_pe(cfg["max_len"], D),
        enc_layers=enc_layers, enc_ln_g=eg, enc_ln_b=eb,
        dec_layers=dec_layers, dec_ln_g=dg, dec_ln_b=db,
        gen_w=dense((D, Vt)), gen_b=jnp.zeros((Vt,), jnp.float32),
    )


# ----------------------------------------------------------------------------
if __name__ == "__main__":
    cfg = dict(
        d_model=32, heads=4, d_ff=64,
        enc_layers=2, dec_layers=2,
        vocab_src=20, vocab_tgt=20, pad=1,
        max_len=32,
    )
    key = jax.random.PRNGKey(0)
    pkey, skey, tkey = jax.random.split(key, 3)
    params = init_params(pkey, cfg)

    batch, src_len, tgt_len = 2, 8, 9
    src = jax.random.randint(skey, (src_len, batch), 2, cfg["vocab_src"] + 1, dtype=jnp.int32)
    tgt = jax.random.randint(tkey, (tgt_len, batch), 2, cfg["vocab_tgt"] + 1, dtype=jnp.int32)
    # add a little padding at the tail of sequence 1 to exercise the masks
    src = src.at[-2:, 1].set(cfg["pad"])
    tgt = tgt.at[-2:, 1].set(cfg["pad"])

    scores, attns, src_reps, tgt_reps = molecular_transformer_forward(params, src, tgt, cfg)
    jax.block_until_ready((scores, attns["std"], src_reps, tgt_reps))

    assert scores.shape == (tgt_len - 1, batch, cfg["vocab_tgt"])
    assert attns["std"].shape == (tgt_len - 1, batch, src_len)
    assert src_reps.shape == (batch, cfg["d_model"])
    assert tgt_reps.shape == (batch, cfg["d_model"])
    assert bool(jnp.all(jnp.isfinite(scores)))
    print("KERNEL_OK")
</pallas_src>

<mosaic_0001>
module attributes {stable_mosaic.version = 11 : i64} {
  func.func @_ln_linear_kernel(%arg0: i32, %arg1: memref<16x32xf32, #tpu.memory_space<vmem>>, %arg2: memref<1x32xf32, #tpu.memory_space<vmem>>, %arg3: memref<1x32xf32, #tpu.memory_space<vmem>>, %arg4: memref<32x96xbf16, #tpu.memory_space<vmem>>, %arg5: memref<1x96xf32, #tpu.memory_space<vmem>>, %arg6: memref<16x96xf32, #tpu.memory_space<vmem>>) attributes {dimension_semantics = [#tpu.dimension_semantics<parallel>], iteration_bounds = array<i64: 1>, scalar_prefetch = 0 : i64, scratch_operands = 0 : i64, tpu.core_type = #tpu.core_type<tc>, window_params = [{transform_indices = @transform_0, window_bounds = array<i64: 16, 32>}, {pipeline_mode = #tpu.pipeline_mode<synchronous>, transform_indices = @transform_1, window_bounds = array<i64: 1, 32>}, {pipeline_mode = #tpu.pipeline_mode<synchronous>, transform_indices = @transform_2, window_bounds = array<i64: 1, 32>}, {pipeline_mode = #tpu.pipeline_mode<synchronous>, transform_indices = @transform_3, window_bounds = array<i64: 32, 96>}, {pipeline_mode = #tpu.pipeline_mode<synchronous>, transform_indices = @transform_4, window_bounds = array<i64: 1, 96>}, {transform_indices = @transform_5, window_bounds = array<i64: 16, 96>}]} {
    %c0 = arith.constant 0 : index
    %c0_0 = arith.constant 0 : index
    %0 = vector.load %arg1[%c0, %c0_0] : memref<16x32xf32, #tpu.memory_space<vmem>>, vector<16x32xf32>
    %c0_1 = arith.constant 0 : index
    %c0_2 = arith.constant 0 : index
    %1 = vector.load %arg2[%c0_1, %c0_2] : memref<1x32xf32, #tpu.memory_space<vmem>>, vector<1x32xf32>
    %c0_3 = arith.constant 0 : index
    %c0_4 = arith.constant 0 : index
    %2 = vector.load %arg3[%c0_3, %c0_4] : memref<1x32xf32, #tpu.memory_space<vmem>>, vector<1x32xf32>
    %cst = arith.constant dense<0.000000e+00> : vector<16xf32>
    %3 = vector.multi_reduction <add>, %0, %cst [1] : vector<16x32xf32> to vector<16xf32>
    %4 = vector.shape_cast %3 : vector<16xf32> to vector<16x1xf32>
    %cst_5 = arith.constant 3.200000e+01 : f32
    %5 = vector.broadcast %cst_5 : f32 to vector<16x1xf32>
    %6 = arith.divf %4, %5 : vector<16x1xf32>
    %7 = vector.broadcast %6 : vector<16x1xf32> to vector<16x32xf32>
    %8 = arith.subf %0, %7 : vector<16x32xf32>
    %9 = arith.mulf %8, %8 : vector<16x32xf32>
    %cst_6 = arith.constant dense<0.000000e+00> : vector<16xf32>
    %10 = vector.multi_reduction <add>, %9, %cst_6 [1] : vector<16x32xf32> to vector<16xf32>
    %11 = vector.shape_cast %10 : vector<16xf32> to vector<16x1xf32>
    %cst_7 = arith.constant 3.200000e+01 : f32
    %12 = vector.broadcast %cst_7 : f32 to vector<16x1xf32>
    %13 = arith.divf %11, %12 : vector<16x1xf32>
    %14 = vector.broadcast %6 : vector<16x1xf32> to vector<16x32xf32>
    %15 = arith.subf %0, %14 : vector<16x32xf32>
    %cst_8 = arith.constant 9.99999997E-7 : f32
    %16 = vector.broadcast %cst_8 : f32 to vector<16x1xf32>
    %17 = arith.addf %13, %16 : vector<16x1xf32>
    %18 = math.rsqrt %17 : vector<16x1xf32>
    %19 = vector.broadcast %18 : vector<16x1xf32> to vector<16x32xf32>
    %20 = arith.mulf %15, %19 : vector<16x32xf32>
    %21 = vector.broadcast %1 : vector<1x32xf32> to vector<16x32xf32>
    %22 = arith.mulf %20, %21 : vector<16x32xf32>
    %23 = vector.broadcast %2 : vector<1x32xf32> to vector<16x32xf32>
    %24 = arith.addf %22, %23 : vector<16x32xf32>
    %25 = arith.truncf %24 : vector<16x32xf32> to vector<16x32xbf16>
    %c0_9 = arith.constant 0 : index
    %c0_10 = arith.constant 0 : index
    %26 = vector.load %arg4[%c0_9, %c0_10] : memref<32x96xbf16, #tpu.memory_space<vmem>>, vector<32x96xbf16>
    %cst_11 = arith.constant dense<0.000000e+00> : vector<16x96xf32>
    %27 = tpu.matmul %25, %26, %cst_11 {dimension_numbers = #tpu.dot_dimension_numbers<[1], [0], [0], [1], [0, 0, 1, 1], [], []>} : vector<16x32xbf16>, vector<32x96xbf16>, vector<16x96xf32> -> vector<16x96xf32>
    %c0_12 = arith.constant 0 : index
    %c0_13 = arith.constant 0 : index
    %28 = vector.load %arg5[%c0_12, %c0_13] : memref<1x96xf32, #tpu.memory_space<vmem>>, vector<1x96xf32>
    %29 = vector.broadcast %28 : vector<1x96xf32> to vector<16x96xf32>
    %30 = arith.addf %27, %29 : vector<16x96xf32>
    %c0_14 = arith.constant 0 : index
    %c0_15 = arith.constant 0 : index
    %31 = vector.load %arg6[%c0_14, %c0_15] : memref<16x96xf32, #tpu.memory_space<vmem>>, vector<16x96xf32>
    tpu.vector_store %arg6[%c0_14, %c0_15], %30 {strides = array<i32>} : memref<16x96xf32, #tpu.memory_space<vmem>>, vector<16x96xf32>,
    return
  }
  func.func @transform_0(%arg0: i32) -> (i32, i32) {
    %c0_i32 = arith.constant 0 : i32
    %c0_i32_0 = arith.constant 0 : i32
    return %arg0, %c0_i32 : i32, i32
  }
  func.func @transform_1(%arg0: i32) -> (i32, i32) {
    %c0_i32 = arith.constant 0 : i32
    %c0_i32_0 = arith.constant 0 : i32
    %c0_i32_1 = arith.constant 0 : i32
    return %c0_i32, %c0_i32_0 : i32, i32
  }
  func.func @transform_2(%arg0: i32) -> (i32, i32) {
    %c0_i32 = arith.constant 0 : i32
    %c0_i32_0 = arith.constant 0 : i32
    %c0_i32_1 = arith.constant 0 : i32
    return %c0_i32, %c0_i32_0 : i32, i32
  }
  func.func @transform_3(%arg0: i32) -> (i32, i32) {
    %c0_i32 = arith.constant 0 : i32
    %c0_i32_0 = arith.constant 0 : i32
    %c0_i32_1 = arith.constant 0 : i32
    return %c0_i32, %c0_i32_0 : i32, i32
  }
  func.func @transform_4(%arg0: i32) -> (i32, i32) {
    %c0_i32 = arith.constant 0 : i32
    %c0_i32_0 = arith.constant 0 : i32
    %c0_i32_1 = arith.constant 0 : i32
    return %c0_i32, %c0_i32_0 : i32, i32
  }
  func.func @transform_5(%arg0: i32) -> (i32, i32) {
    %c0_i32 = arith.constant 0 : i32
    %c0_i32_0 = arith.constant 0 : i32
    return %arg0, %c0_i32 : i32, i32
  }
}

</mosaic_0001>

<llo_original>
// kernel: tpu_custom_call.1
$region0: #{tpu_custom_call.1}
  #allocation0 [shape = 'u32[]', space=smem, size = 0x4, offset = 0x4, fixed_abs, tag = 'smem constant byte address 0x4 - core index']
  #allocation1 [shape = 'u32[144,128]{1,0:T(1,128)}', space=vmem, size = 0x12000, scoped, tag = 'internal scratch']
  %s0 = inlined_call_operand.hbm [shape: f32[16,32], index: 0, kind: input, shape index: {}]
  %s1 = inlined_call_operand.vmem [shape: f32[1,32], index: 1, kind: input, shape index: {}]
  %s2 = inlined_call_operand.vmem [shape: f32[1,32], index: 2, kind: input, shape index: {}]
  %s3 = inlined_call_operand.hbm [shape: bf16[32,96], index: 3, kind: input, shape index: {}]
  %s4 = inlined_call_operand.vmem [shape: f32[1,96], index: 4, kind: input, shape index: {}]
  %s5 = inlined_call_operand.hbm [shape: f32[16,96], index: 5, kind: output, shape index: {}]
  %s6 = sld [smem:[#allocation0]]
  $region38: #{tpu_custom_call.1} parent=0
    _
  %s8 = ssub.s32 1, %s6
  %s9 = scalar_select 0, %s8, %s6
  $region1: #{tpu_custom_call.1} parent=0
    #allocation2 [shape = 'u8[8192]{0}', space=vmem, size = 0x2000, scoped, tag = 'input window, operand 0, single buffered']
    #allocation3 [shape = 's32[1]{0}', space=sflag, size = 0x4, scoped, tag = 'scoped memory for tpu_custom_call.1']
    #allocation4 [shape = 's32[1]{0}', space=sflag, size = 0x4, scoped, tag = 'scoped memory for tpu_custom_call.1']
    #allocation5 [shape = 'u8[8192]{0}', space=vmem, size = 0x2000, scoped, tag = 'input window, operand 3, single buffered']
    #allocation6 [shape = 's32[1]{0}', space=sflag, size = 0x4, scoped, tag = 'scoped memory for tpu_custom_call.1']
    #allocation7 [shape = 'u8[8192]{0}', space=vmem, size = 0x2000, scoped, tag = 'output window, operand 0, single buffered']
    %10 = vsyncpa [#allocation3], 0
    %11 = vsyncpa [#allocation6], 0
    %12 = vsyncpa [#allocation4], 0
    // Predicated region
    $region2: #{tpu_custom_call.1} parent=1 // pred_check
      _
    $region3: #{tpu_custom_call.1} parent=1 // pred_check_branch
      %14 = sbr.rel (0) target = $region5
    $region4: #{tpu_custom_call.1} parent=1 // pred_region
      %s16 = ssub.s32 256, 256
      %17 = vsyncadd [#allocation3], %s16
      %s18 = sshll.u32 [#allocation2], 4
      %s19 = int_to_ptr.vmem [resolvable:$true] %s18
      %24 = dma.hbm_to_vmem [thread:$0]  %s0, 256, %s19, [#allocation3], 128, 128, 8
    $region5: #{tpu_custom_call.1} parent=1 // pred_fallthru
      _
    // Predicated region
    $region6: #{tpu_custom_call.1} parent=1 // pred_check
      _
    $region7: #{tpu_custom_call.1} parent=1 // pred_check_branch
      %26 = sbr.rel (0) target = $region9
    $region8: #{tpu_custom_call.1} parent=1 // pred_region
      _
    $region9: #{tpu_custom_call.1} parent=1 // pred_fallthru
      _
    // Predicated region
    $region10: #{tpu_custom_call.1} parent=1 // pred_check
      _
    $region11: #{tpu_custom_call.1} parent=1 // pred_check_branch
      %28 = sbr.rel (0) target = $region13
    $region12: #{tpu_custom_call.1} parent=1 // pred_region
      _
    $region13: #{tpu_custom_call.1} parent=1 // pred_fallthru
      _
    // Predicated region
    $region14: #{tpu_custom_call.1} parent=1 // pred_check
      _
    $region15: #{tpu_custom_call.1} parent=1 // pred_check_branch
      %30 = sbr.rel (0) target = $region17
    $region16: #{tpu_custom_call.1} parent=1 // pred_region
      %s32 = ssub.s32 256, 256
      %33 = vsyncadd [#allocation6], %s32
      %s34 = sshll.u32 [#allocation5], 4
      %s35 = int_to_ptr.vmem [resolvable:$true] %s34
      %40 = dma.hbm_to_vmem [thread:$0]  %s3, 256, %s35, [#allocation6], 64, 64, 4
    $region17: #{tpu_custom_call.1} parent=1 // pred_fallthru
      _
    // Predicated region
    $region18: #{tpu_custom_call.1} parent=1 // pred_check
      _
    $region19: #{tpu_custom_call.1} parent=1 // pred_check_branch
      %42 = sbr.rel (0) target = $region21
    $region20: #{tpu_custom_call.1} parent=1 // pred_region
      _
    $region21: #{tpu_custom_call.1} parent=1 // pred_fallthru
      _
    // Predicated region
    $region22: #{tpu_custom_call.1} parent=1 // pred_check
      _
    $region23: #{tpu_custom_call.1} parent=1 // pred_check_branch
      %44 = sbr.rel (0) target = $region25
    $region24: #{tpu_custom_call.1} parent=1 // pred_region
      %45 = dma.done [#allocation3], 256
    $region25: #{tpu_custom_call.1} parent=1 // pred_fallthru
      _
    // Predicated region
    $region26: #{tpu_custom_call.1} parent=1 // pred_check
      _
    $region27: #{tpu_custom_call.1} parent=1 // pred_check_branch
      %47 = sbr.rel (0) target = $region29
    $region28: #{tpu_custom_call.1} parent=1 // pred_region
      %48 = dma.done [#allocation6], 256
    $region29: #{tpu_custom_call.1} parent=1 // pred_fallthru
      _
    %v50 = vld [vmem:[#allocation2] sm:$0xff]
    %v51 = vld [vmem:[#allocation2 + $0x8] sm:$0xff]
    %v52 = vld [vmem:[%s1] sm:$0x1]
    %v53 = vld [vmem:[%s2] sm:$0x1]
    %vm54 = vcmask 261120
    %v55 = vsel %vm54, %v50, 0.0
    %56 = vadd.xlane.f32.xlu0 %v55
    %v57 = vpop.xlane.xlu0 %56
    %v58 = vsel %vm54, %v51, 0.0
    %59 = vadd.xlane.f32.xlu0 %v58
    %v60 = vpop.xlane.xlu0 %59
    %v61 = vrcp.pop 32.0
    %v62 = vmul.f32 %v57, %v61
    %v63 = vmul.f32 %v60, %v61
    %v64 = vsub.f32 %v50, %v62
    %v65 = vsub.f32 %v51, %v63
    %v66 = vmul.f32 %v64, %v64
    %v67 = vmul.f32 %v65, %v65
    %v68 = vsel %vm54, %v66, 0.0
    %69 = vadd.xlane.f32.xlu0 %v68
    %v70 = vpop.xlane.xlu0 %69
    %v71 = vsel %vm54, %v67, 0.0
    %72 = vadd.xlane.f32.xlu0 %v71
    %v73 = vpop.xlane.xlu0 %72
    %v74 = vmul.f32 %v70, %v61
    %v75 = vmul.f32 %v73, %v61
    %v76 = vadd.f32 %v74, 1e-06
    %v77 = vadd.f32 %v75, 1e-06
    %v78 = vrsqrt.pop %v76
    %v79 = vrsqrt.pop %v77
    %v80 = vmul.f32 %v64, %v78
    %v81 = vmul.f32 %v65, %v79
    %v83 = vlaneseq
    %v84 = vshrl.u32 %v83, 7
    %v85 = vsub.s32 0, %v84
    %v86 = vrot.slane %v52, %v85
    %v88 = vmul.f32 %v80, %v86
    %v89 = vmul.f32 %v81, %v86
    %v91 = vlaneseq
    %v92 = vshrl.u32 %v91, 7
    %v93 = vsub.s32 0, %v92
    %v94 = vrot.slane %v53, %v93
    %v96 = vadd.f32 %v88, %v94
    %v97 = vadd.f32 %v89, %v94
    %v98 = vpack.c.bf16 %v97, %v96
    %v99 = vld [vmem:[#allocation5] sm:$0xf]
    %v100 = vld [vmem:[#allocation5 + $0x4] sm:$0xf]
    %v101 = vld [vmem:[#allocation5 + $0x8] sm:$0xf]
    %v102 = vld [vmem:[#allocation5 + $0xc] sm:$0xf]
    %v103 = vld [vmem:[%s4] sm:$0x1]
    %v105 = vlaneseq
    %v106 = vshrl.u32 %v105, 7
    %v107 = vsub.s32 0, %v106
    %v108 = vrot.slane %v103, %v107
    %v114 = vunpack.c.l.b16 %v99
    %v115 = vunpack.c.l.b16 %v100
    %v116 = vunpack.c.l.b16 %v101
    %v117 = vunpack.c.l.b16 %v102
    %v118 = vpack.c.b16 %v115, %v114
    %v119 = vpack.c.b16 %v117, %v116
    %v123 = vsel %vm54, %v98, 0
    %125 = vmatprep.subr.bf16.mxu0 0
    %126 = vmatpush1.bf16.msra.mxu0 %v118
    %127 = vmatprep.subr.bf16.mxu0 0
    %128 = vmatpush1.bf16.msra.mxu0 %v119
    %129 = vmatprep.subr.bf16.mxu0 0
    %130 = vmatpush1.bf16.msra.mxu0 0
    %131 = vmatprep.subr.bf16.mxu0 0
    %132 = vmatpush1.bf16.msra.mxu0 0
    %133 = vmatprep.subr.bf16.mxu0 0
    %134 = vmatpush1.bf16.msra.mxu0 0
    %135 = vmatprep.subr.bf16.mxu0 0
    %136 = vmatpush1.bf16.msra.mxu0 0
    %137 = vmatprep.subr.bf16.mxu0 0
    %138 = vmatpush1.bf16.msra.mxu0 0
    %139 = vmatprep.subr.bf16.mxu0 0
    %140 = vmatpush1.bf16.msra.mxu0 0
    %141 = vmatprep.subr.bf16.mxu0 0
    %142 = vmatpush1.bf16.msra.mxu0 0
    %143 = vmatprep.subr.bf16.mxu0 0
    %144 = vmatpush1.bf16.msra.mxu0 0
    %145 = vmatprep.subr.bf16.mxu0 0
    %146 = vmatpush1.bf16.msra.mxu0 0
    %147 = vmatprep.subr.bf16.mxu0 0
    %148 = vmatpush1.bf16.msra.mxu0 0
    %149 = vmatprep.subr.bf16.mxu0 0
    %150 = vmatpush1.bf16.msra.mxu0 0
    %151 = vmatprep.subr.bf16.mxu0 0
    %152 = vmatpush1.bf16.msra.mxu0 0
    %153 = vmatprep.subr.bf16.mxu0 0
    %154 = vmatpush1.bf16.msra.mxu0 0
    %155 = vmatprep.subr.bf16.mxu0 0
    %156 = vmatpush1.bf16.msra.mxu0 0
    %157 = vmatprep.mubr.bf16.mxu0 0
    %158 = vmatmul.mubr.bf16.gmra.mrb[0].mxu0 %v123
    %v159 = vpop.f32.mrb[0].mxu0
    %v160 = vadd.f32 %v108, %v159
    %v161 = vpop.f32.mrb[0].mxu0
    %v162 = vpop.f32.mrb[0].mxu0
    %v163 = vadd.f32 %v108, %v162
    %v164 = vpop.f32.mrb[0].mxu0
    %165 = vdwg.mxu0
    %vm166 = vcmask 785408
    %167 = vst.msk [vmem:[#allocation7] sm:$0xff] %vm166, %v160
    %168 = vst.msk [vmem:[#allocation7 + $0x8] sm:$0xff] %vm166, %v163
    // Predicated region
    $region30: #{tpu_custom_call.1} parent=1 // pred_check
      _
    $region31: #{tpu_custom_call.1} parent=1 // pred_check_branch
      %170 = sbr.rel (0) target = $region33
    $region32: #{tpu_custom_call.1} parent=1 // pred_region
      %s172 = ssub.s32 256, 256
      %173 = vsyncadd [#allocation4], %s172
      %s174 = sshll.u32 [#allocation7], 4
      %s175 = int_to_ptr.vmem [resolvable:$true] %s174
      %180 = dma.vmem_to_hbm [thread:$0]  %s175, 256, %s5, [#allocation4], 128, 128, 8
    $region33: #{tpu_custom_call.1} parent=1 // pred_fallthru
      _
    // Predicated region
    $region34: #{tpu_custom_call.1} parent=1 // pred_check
      _
    $region35: #{tpu_custom_call.1} parent=1 // pred_check_branch
      %182 = sbr.rel (0) target = $region37
    $region36: #{tpu_custom_call.1} parent=1 // pred_region
      %183 = dma.done [#allocation4], 256
    $region37: #{tpu_custom_call.1} parent=1 // pred_fallthru
      _
    %184 = vsyncpa [#allocation3], 1
    %185 = vsyncpa [#allocation6], 1
    %186 = vsyncpa [#allocation4], 1

</llo_original>
